<compile_context>
chip_gen: v7x
topology: tpu7x:2x2x1
jax: 0.10.0
libtpu: 0.0.40
codegen_flags: <defaults>
</compile_context>

<pallas_src>
import functools

import jax
import jax.numpy as jnp
from jax.experimental import pallas as pl
from jax.experimental.pallas import tpu as pltpu


# -----------------------------------------------------------------------------
# Helpers
# -----------------------------------------------------------------------------
def _round_up(x, m):
    return ((x + m - 1) // m) * m


def _pick_row_tile(n, h, f_pad, dtype_bytes=4, vmem_budget=8 * 1024 * 1024):
    """Row tile over the node axis.

    Keeps the double-buffered x/out blocks plus the resident weight block under
    a conservative VMEM budget so the kernel is portable across v5e (16 MiB
    scoped default), v6e/v7x (32 MiB scoped, 64 MiB physical on v7x).
    """
    cap = 512
    while cap > 8 and (
        2 * cap * (h + f_pad) * dtype_bytes + h * f_pad * dtype_bytes > vmem_budget
    ):
        cap //= 2
    if n <= cap:
        return n          # full-N block (legal even if N is not a multiple of 8)
    return cap            # multiple of 8; cdiv grid handles the partial edge


# -----------------------------------------------------------------------------
# Pallas kernel: fused  y = x[:, T-1] @ W_pad + b_pad
# -----------------------------------------------------------------------------
def _forecast_linear_kernel(x_ref, w_ref, b_ref, o_ref):
    # x_ref : (tn, H)      last-timestep rows for this (batch, node-tile)
    # w_ref : (H, F_pad)   weight, lane-padded to a multiple of 128
    # b_ref : (1, F_pad)   bias, lane-padded
    # o_ref : (tn, F_pad)  lane-dense output block (no masked stores)
    y = jnp.dot(x_ref[...], w_ref[...], preferred_element_type=jnp.float32)
    y = y + b_ref[...].astype(jnp.float32)   # bias in f32 before the final cast
    o_ref[...] = y.astype(o_ref.dtype)


@functools.partial(jax.jit, static_argnames=("out_dim",))
def _forecast_forward(hidden_states_dif, w_pad, b_pad, *, out_dim):
    """(B, T, N, H) -> (B, 1, N, out_dim) via a single fused Pallas GEMM."""
    B, T, N, H = hidden_states_dif.shape
    Hw, F_pad = w_pad.shape
    assert Hw == H, (Hw, H)

    tn = _pick_row_tile(N, H, F_pad)
    grid = (B, pl.cdiv(N, tn))
    t_last = T - 1

    out_pad = pl.pallas_call(
        _forecast_linear_kernel,
        out_shape=jax.ShapeDtypeStruct((B, 1, N, F_pad), hidden_states_dif.dtype),
        grid_spec=pltpu.PrefetchScalarGridSpec(
            num_scalar_prefetch=0,
            grid=grid,
            in_specs=[
                # Fused slice: pin the T axis to the last timestep; B and T are
                # squeezed (None) so the kernel sees a (tn, H) tile.
                pl.BlockSpec((None, None, tn, H), lambda b, n: (b, t_last, n, 0)),
                # Weight and bias are fully resident (small) and re-used by
                # every grid step.
                pl.BlockSpec((H, F_pad), lambda b, n: (0, 0)),
                pl.BlockSpec((1, F_pad), lambda b, n: (0, 0)),
            ],
            out_specs=pl.BlockSpec(
                (None, None, tn, F_pad), lambda b, n: (b, 0, n, 0)
            ),
        ),
        compiler_params=pltpu.CompilerParams(
            dimension_semantics=("parallel", "parallel"),
        ),
    )(hidden_states_dif, w_pad, b_pad.reshape(1, F_pad))

    if F_pad == out_dim:
        return out_pad
    return out_pad[..., :out_dim]


# -----------------------------------------------------------------------------
# Forecast module (functional)
# -----------------------------------------------------------------------------
class Forecast:
    def __init__(self, hidden_dim, forecast_hidden_dim=None, *, key, **model_args):
        self.output_seq_len = 12
        self.hidden_dim = hidden_dim
        self.forecast_hidden_dim = forecast_hidden_dim
        self.model_args = model_args
        self.k_t = model_args.get("k_t", 2)

        # torch.nn.Linear default init: U(-1/sqrt(fan_in), 1/sqrt(fan_in)).
        # Stored transposed to (hidden_dim, forecast_hidden_dim) so the kernel
        # computes a plain x @ W.
        kw, kb = jax.random.split(key)
        bound = 1.0 / (hidden_dim ** 0.5)
        self.fc_w = jax.random.uniform(
            kw, (hidden_dim, forecast_hidden_dim), jnp.float32, -bound, bound
        )
        self.fc_b = jax.random.uniform(
            kb, (forecast_hidden_dim,), jnp.float32, -bound, bound
        )

        # Lane-dense padding of the output feature axis to a multiple of 128
        # (done once at init); the wrapper slices the padding off after the
        # kernel, so numerics are unchanged.
        f_pad = _round_up(forecast_hidden_dim, 128)
        self.f_pad = f_pad
        if f_pad == forecast_hidden_dim:
            self.fc_w_pad = self.fc_w
            self.fc_b_pad = self.fc_b
        else:
            self.fc_w_pad = jnp.pad(
                self.fc_w, ((0, 0), (0, f_pad - forecast_hidden_dim))
            )
            self.fc_b_pad = jnp.pad(self.fc_b, (0, f_pad - forecast_hidden_dim))

    def __call__(self, gated_history_data, hidden_states_dif):
        # The reference module's inner `for` loop only builds concatenation
        # temporaries that are never appended to `predict` (dead code); it has
        # no effect on the output and is therefore not executed on-device.
        # TODO(synk): re-introduce the loop if the upstream module ever starts
        # consuming its temporaries.
        del gated_history_data
        return _forecast_forward(
            hidden_states_dif,
            self.fc_w_pad,
            self.fc_b_pad,
            out_dim=self.forecast_hidden_dim,
        )


# -----------------------------------------------------------------------------
# Pure-JAX reference for correctness check
# -----------------------------------------------------------------------------
def reference_forward(module, gated_history_data, hidden_states_dif):
    predict = hidden_states_dif[:, -1:, :, :]
    return jnp.einsum("btnh,hf->btnf", predict, module.fc_w) + module.fc_b


if __name__ == "__main__":
    key = jax.random.PRNGKey(0)
    k_param, k_hist, k_dif = jax.random.split(key, 3)

    B, T, N, H = 2, 8, 16, 32
    F = 32  # forecast_hidden_dim

    module = Forecast(hidden_dim=H, forecast_hidden_dim=F,
                      key=k_param, gap=4, k_t=2)

    gated_history_data = jax.random.normal(k_hist, (B, T, N, H), jnp.float32)
    hidden_states_dif = jax.random.normal(k_dif, (B, T, N, H), jnp.float32)

    out = module(gated_history_data, hidden_states_dif)
    out = jax.block_until_ready(out)

    ref = reference_forward(module, gated_history_data, hidden_states_dif)
    assert out.shape == (B, 1, N, F), out.shape
    assert jnp.allclose(out, ref, atol=1e-5, rtol=1e-5), "mismatch vs reference"

    print("KERNEL_OK")
</pallas_src>

<mosaic_0001>
module attributes {stable_mosaic.version = 11 : i64} {
  func.func @_forecast_linear_kernel(%arg0: i32, %arg1: i32, %arg2: memref<1x1x16x32xf32, #tpu.memory_space<vmem>>, %arg3: memref<32x128xf32, #tpu.memory_space<vmem>>, %arg4: memref<1x128xf32, #tpu.memory_space<vmem>>, %arg5: memref<1x1x16x128xf32, #tpu.memory_space<vmem>>) attributes {dimension_semantics = [#tpu.dimension_semantics<parallel>, #tpu.dimension_semantics<parallel>], iteration_bounds = array<i64: 2, 1>, scalar_prefetch = 0 : i64, scratch_operands = 0 : i64, tpu.core_type = #tpu.core_type<tc>, window_params = [{transform_indices = @transform_0, window_bounds = array<i64: 1, 1, 16, 32>}, {pipeline_mode = #tpu.pipeline_mode<synchronous>, transform_indices = @transform_1, window_bounds = array<i64: 32, 128>}, {pipeline_mode = #tpu.pipeline_mode<synchronous>, transform_indices = @transform_2, window_bounds = array<i64: 1, 128>}, {transform_indices = @transform_3, window_bounds = array<i64: 1, 1, 16, 128>}]} {
    %c0 = arith.constant 0 : index
    %c0_0 = arith.constant 0 : index
    %c0_1 = arith.constant 0 : index
    %c0_2 = arith.constant 0 : index
    %0 = vector.load %arg2[%c0, %c0_0, %c0_1, %c0_2] : memref<1x1x16x32xf32, #tpu.memory_space<vmem>>, vector<1x1x16x32xf32>
    %1 = vector.shape_cast %0 : vector<1x1x16x32xf32> to vector<16x32xf32>
    %c0_3 = arith.constant 0 : index
    %c0_4 = arith.constant 0 : index
    %2 = vector.load %arg3[%c0_3, %c0_4] : memref<32x128xf32, #tpu.memory_space<vmem>>, vector<32x128xf32>
    %cst = arith.constant dense<0.000000e+00> : vector<16x128xf32>
    %3 = tpu.matmul %1, %2, %cst {dimension_numbers = #tpu.dot_dimension_numbers<[1], [0], [0], [1], [0, 0, 1, 1], [], []>} : vector<16x32xf32>, vector<32x128xf32>, vector<16x128xf32> -> vector<16x128xf32>
    %c0_5 = arith.constant 0 : index
    %c0_6 = arith.constant 0 : index
    %4 = vector.load %arg4[%c0_5, %c0_6] : memref<1x128xf32, #tpu.memory_space<vmem>>, vector<1x128xf32>
    %5 = vector.broadcast %4 : vector<1x128xf32> to vector<16x128xf32>
    %6 = arith.addf %3, %5 : vector<16x128xf32>
    %c0_7 = arith.constant 0 : index
    %c0_8 = arith.constant 0 : index
    %c0_9 = arith.constant 0 : index
    %c0_10 = arith.constant 0 : index
    %7 = vector.load %arg5[%c0_7, %c0_8, %c0_9, %c0_10] : memref<1x1x16x128xf32, #tpu.memory_space<vmem>>, vector<1x1x16x128xf32>
    %8 = vector.shape_cast %7 : vector<1x1x16x128xf32> to vector<16x128xf32>
    %9 = vector.shape_cast %6 : vector<16x128xf32> to vector<1x1x16x128xf32>
    tpu.vector_store %arg5[%c0_7, %c0_8, %c0_9, %c0_10], %9 {strides = array<i32>} : memref<1x1x16x128xf32, #tpu.memory_space<vmem>>, vector<1x1x16x128xf32>,
    return
  }
  func.func @transform_0(%arg0: i32, %arg1: i32) -> (i32, i32, i32, i32) {
    %c7_i32 = arith.constant 7 : i32
    %c0_i32 = arith.constant 0 : i32
    %c0_i32_0 = arith.constant 0 : i32
    return %arg0, %c7_i32, %arg1, %c0_i32 : i32, i32, i32, i32
  }
  func.func @transform_1(%arg0: i32, %arg1: i32) -> (i32, i32) {
    %c0_i32 = arith.constant 0 : i32
    %c0_i32_0 = arith.constant 0 : i32
    %c0_i32_1 = arith.constant 0 : i32
    return %c0_i32, %c0_i32_0 : i32, i32
  }
  func.func @transform_2(%arg0: i32, %arg1: i32) -> (i32, i32) {
    %c0_i32 = arith.constant 0 : i32
    %c0_i32_0 = arith.constant 0 : i32
    %c0_i32_1 = arith.constant 0 : i32
    return %c0_i32, %c0_i32_0 : i32, i32
  }
  func.func @transform_3(%arg0: i32, %arg1: i32) -> (i32, i32, i32, i32) {
    %c0_i32 = arith.constant 0 : i32
    %c0_i32_0 = arith.constant 0 : i32
    %c0_i32_1 = arith.constant 0 : i32
    return %arg0, %c0_i32, %arg1, %c0_i32_0 : i32, i32, i32, i32
  }
}

</mosaic_0001>

<llo_original>
// kernel: _forecast_forward.1
$region0: #{_forecast_forward.1}
  #allocation0 [shape = 'u32[]', space=smem, size = 0x4, offset = 0x4, fixed_abs, tag = 'smem constant byte address 0x4 - core index']
  #allocation1 [shape = 'u32[144,128]{1,0:T(1,128)}', space=vmem, size = 0x12000, scoped, tag = 'internal scratch']
  %s0 = inlined_call_operand.hbm [shape: f32[2,8,16,32], index: 0, kind: input, shape index: {}]
  %s1 = inlined_call_operand.hbm [shape: f32[32,128], index: 1, kind: input, shape index: {}]
  %s2 = inlined_call_operand.vmem [shape: f32[1,128], index: 2, kind: input, shape index: {}]
  %s3 = inlined_call_operand.hbm [shape: f32[2,1,16,128], index: 3, kind: output, shape index: {}]
  %s4 = sld [smem:[#allocation0]]
  $region53: #{_forecast_forward.1} parent=0
    _
  %s6 = ssub.s32 1, %s4
  %s7 = scalar_select 0, %s6, %s4
  $region1: #{_forecast_forward.1} parent=0
    #allocation2 [shape = 'u8[16384]{0}', space=vmem, size = 0x4000, scoped, tag = 'input window, operand 0']
    #allocation3 [shape = 's32[2]{0}', space=sflag, size = 0x8, scoped, tag = 'scoped memory for _forecast_forward.1']
    #allocation4 [shape = 's32[2]{0}', space=sflag, size = 0x8, scoped, tag = 'scoped memory for _forecast_forward.1']
    #allocation5 [shape = 'u8[16384]{0}', space=vmem, size = 0x4000, scoped, tag = 'input window, operand 1, single buffered']
    #allocation6 [shape = 's32[1]{0}', space=sflag, size = 0x4, scoped, tag = 'scoped memory for _forecast_forward.1']
    #allocation7 [shape = 'u8[16384]{0}', space=vmem, size = 0x4000, scoped, tag = 'output window, operand 0']
    %8 = vsyncpa [#allocation3], 0
    %s9 = scalar_lea.sflag [#allocation3], 1
    %10 = vsyncpa %s9, 0
    %11 = vsyncpa [#allocation6], 0
    %12 = vsyncpa [#allocation4], 0
    %s13 = scalar_lea.sflag [#allocation4], 1
    %14 = vsyncpa %s13, 0
    loop: start=0, step=1, limit=4
    $region2: #{_forecast_forward.1} parent=1 // loop_pre_header
      _
    $region3: #{_forecast_forward.1} parent=1 // loop_header
      %s16 = sphi 0, %s20
      %p17 = scmp.ge.s32.totalorder %s16, 4
      %s23 = sphi 0, %s35
      %s24 = sphi 0, %s31
      %s25 = sphi 0, %s23
      %s26 = sphi 0, %s24
      %s27 = sphi 0, %s25
      %s28 = sphi 0, %s26
      %s40 = sphi 0, %s42
      %s43 = sphi 0, %s40
      %s44 = sphi 0, %s43
      %s60 = sphi 0, %s44
      %s64 = sphi 0, %s64
      %s66 = sphi 0, %s64
      %s67 = sphi 0, %s66
      %s81 = sphi 0, %s67
      %s85 = sphi 0, %s85
      %s87 = sphi 0, %s85
      %s88 = sphi 0, %s87
      %s102 = sphi 0, %s88
      %s110 = sphi 0, %s112
      %s113 = sphi 0, %s110
      %s114 = sphi 0, %s113
      %s130 = sphi 0, %s114
    $region4: #{_forecast_forward.1} parent=1 // loop_header_branch
      %19 = sbr.rel (%p17) target = $region8
    $region5: #{_forecast_forward.1} parent=1 // loop_body
      %s21 = ssub.s32 %s16, 1
      %s22 = ssub.s32 %s16, 2
      %s29 = sadd.s32 1, %s24
      %p30 = scmp.ge.s32.totalorder %s29, 1
      %s31 = scalar_select %p30, 0, %s29
      %s32 = sadd.s32 1, %s23
      %s33 = scalar_select %p30, %s32, %s23
      %p34 = scmp.ge.s32.totalorder %s33, 2
      %s35 = scalar_select %p34, 0, %s33
      %s36 = ssub.s32 %s23, %s35
      %s37 = ssub.s32 %s24, %s31
      %s38 = sor.u32 %s36, %s37
      %p39 = scmp.eq.s32.totalorder %s38, 0
      %s41 = sadd.s32 %s40, 1
      %s42 = scalar_select %p39, %s40, %s41
      %p45 = pneg %p39
      %p46 = scmp.eq.s32.totalorder %s16, 1
      %p47 = por %p45, %p46
      %p48 = scmp.ne.s32.totalorder %s40, %s43
      %p49 = scmp.eq.s32.totalorder %s16, 0
      %p50 = por %p48, %p49
      %p51 = scmp.ne.s32.totalorder %s40, %s43
      %p52 = scmp.eq.s32.totalorder %s21, 1
      %p53 = por %p51, %p52
      %p54 = scmp.ne.s32.totalorder %s43, %s44
      %p55 = scmp.eq.s32.totalorder %s21, 0
      %p56 = por %p54, %p55
      %p57 = scmp.ne.s32.totalorder %s43, %s44
      %p58 = scmp.eq.s32.totalorder %s22, 1
      %p59 = por %p57, %p58
      %p61 = scmp.ne.s32.totalorder %s44, %s60
      %p62 = scmp.eq.s32.totalorder %s22, 0
      %p63 = por %p61, %p62
      %s65 = sadd.s32 %s64, 1
      %p68 = scmp.eq.s32.totalorder %s16, 1
      %p69 = scmp.ne.s32.totalorder %s64, %s66
      %p70 = scmp.eq.s32.totalorder %s16, 0
      %p71 = por %p69, %p70
      %p72 = scmp.ne.s32.totalorder %s64, %s66
      %p73 = scmp.eq.s32.totalorder %s21, 1
      %p74 = por %p72, %p73
      %p75 = scmp.ne.s32.totalorder %s66, %s67
      %p76 = scmp.eq.s32.totalorder %s21, 0
      %p77 = por %p75, %p76
      %p78 = scmp.ne.s32.totalorder %s66, %s67
      %p79 = scmp.eq.s32.totalorder %s22, 1
      %p80 = por %p78, %p79
      %p82 = scmp.ne.s32.totalorder %s67, %s81
      %p83 = scmp.eq.s32.totalorder %s22, 0
      %p84 = por %p82, %p83
      %s86 = sadd.s32 %s85, 1
      %p89 = scmp.eq.s32.totalorder %s16, 1
      %p90 = scmp.ne.s32.totalorder %s85, %s87
      %p91 = scmp.eq.s32.totalorder %s16, 0
      %p92 = por %p90, %p91
      %p93 = scmp.ne.s32.totalorder %s85, %s87
      %p94 = scmp.eq.s32.totalorder %s21, 1
      %p95 = por %p93, %p94
      %p96 = scmp.ne.s32.totalorder %s87, %s88
      %p97 = scmp.eq.s32.totalorder %s21, 0
      %p98 = por %p96, %p97
      %p99 = scmp.ne.s32.totalorder %s87, %s88
      %p100 = scmp.eq.s32.totalorder %s22, 1
      %p101 = por %p99, %p100
      %p103 = scmp.ne.s32.totalorder %s88, %s102
      %p104 = scmp.eq.s32.totalorder %s22, 0
      %p105 = por %p103, %p104
      %s106 = ssub.s32 %s23, %s35
      %s107 = ssub.s32 %s24, %s31
      %s108 = sor.u32 %s106, %s107
      %p109 = scmp.eq.s32.totalorder %s108, 0
      %s111 = sadd.s32 %s110, 1
      %s112 = scalar_select %p109, %s110, %s111
      %p115 = pneg %p109
      %p116 = scmp.eq.s32.totalorder %s16, 1
      %p117 = por %p115, %p116
      %p118 = scmp.ne.s32.totalorder %s110, %s113
      %p119 = scmp.eq.s32.totalorder %s16, 0
      %p120 = por %p118, %p119
      %p121 = scmp.ne.s32.totalorder %s110, %s113
      %p122 = scmp.eq.s32.totalorder %s21, 1
      %p123 = por %p121, %p122
      %p124 = scmp.ne.s32.totalorder %s113, %s114
      %p125 = scmp.eq.s32.totalorder %s21, 0
      %p126 = por %p124, %p125
      %p127 = scmp.ne.s32.totalorder %s113, %s114
      %p128 = scmp.eq.s32.totalorder %s22, 1
      %p129 = por %p127, %p128
      %p131 = scmp.ne.s32.totalorder %s114, %s130
      %p132 = scmp.eq.s32.totalorder %s22, 0
      %p133 = por %p131, %p132
      %p134 = scmp.le.s32.totalorder 1, %s16
      %p135 = scmp.lt.s32.totalorder %s16, 3
      %p136 = pnand %p134, %p135
      %p137 = pneg %p136
      // Predicated region
      $region9: #{_forecast_forward.1} parent=5 // pred_check
        _
      $region10: #{_forecast_forward.1} parent=5 // pred_check_branch
        %139 = sbr.rel (%p136) target = $region12
      $region11: #{_forecast_forward.1} parent=5 // pred_region
        %s140 = ssub.s32 %s16, 1
        // Predicated region
        $region13: #{_forecast_forward.1} parent=11 // pred_check
          %p141 = pneg %p77
        $region14: #{_forecast_forward.1} parent=11 // pred_check_branch
          %143 = sbr.rel (%p141) target = $region16
        $region15: #{_forecast_forward.1} parent=11 // pred_region
          %s145 = ssub.s32 512, 512
          %146 = vsyncadd [#allocation6], %s145
          %s147 = sshll.u32 [#allocation5], 4
          %s148 = int_to_ptr.vmem [resolvable:$true] %s147
          %153 = dma.hbm_to_vmem [thread:$0]  %s1, 512, %s148, [#allocation6], 128, 128, 8
        $region16: #{_forecast_forward.1} parent=11 // pred_fallthru
          _
        // Predicated region
        $region17: #{_forecast_forward.1} parent=11 // pred_check
          %p154 = pneg %p98
        $region18: #{_forecast_forward.1} parent=11 // pred_check_branch
          %156 = sbr.rel (%p154) target = $region20
        $region19: #{_forecast_forward.1} parent=11 // pred_region
          _
        $region20: #{_forecast_forward.1} parent=11 // pred_fallthru
          _
      $region12: #{_forecast_forward.1} parent=5 // pred_fallthru
        _
      %p157 = scmp.lt.s32.totalorder %s16, 2
      // Predicated region
      $region21: #{_forecast_forward.1} parent=5 // pred_check
        %p158 = pneg %p157
      $region22: #{_forecast_forward.1} parent=5 // pred_check_branch
        %160 = sbr.rel (%p158) target = $region24
      $region23: #{_forecast_forward.1} parent=5 // pred_region
        // Predicated region
        $region25: #{_forecast_forward.1} parent=23 // pred_check
          %p161 = pneg %p50
        $region26: #{_forecast_forward.1} parent=23 // pred_check_branch
          %163 = sbr.rel (%p161) target = $region28
        $region27: #{_forecast_forward.1} parent=23 // pred_region
          %s164 = sand.u32 %s40, 1
          %s165 = scalar_lea.sflag [#allocation3], %s164
          %s166 = sand.u32 %s40, 1
          %s167 = smul.addr %s166, 16
          %s168 = scalar_lea.vmem [#allocation2], %s167
          %s169 = smul.u32 2, %s24
          %s171 = ssub.s32 256, 256
          %172 = vsyncadd %s165, %s171
          %s173 = sadd.s32 %s169, 14
          %s174 = smul.addr %s23, 16
          %s175 = sadd.s32 %s173, %s174
          %s176 = smul.addr %s175, 128
          %s177 = scalar_lea.hbm %s0, %s176
          %s178 = sshll.u32 %s168, 4
          %s179 = int_to_ptr.vmem [resolvable:$true] %s178
          %184 = dma.hbm_to_vmem [thread:$0]  %s177, 256, %s179, %s165, 128, 128, 8
        $region28: #{_forecast_forward.1} parent=23 // pred_fallthru
          _
      $region24: #{_forecast_forward.1} parent=5 // pred_fallthru
        _
      %p185 = scmp.le.s32.totalorder 1, %s16
      %p186 = scmp.lt.s32.totalorder %s16, 3
      %p187 = pnand %p185, %p186
      %p188 = pneg %p187
      // Predicated region
      $region29: #{_forecast_forward.1} parent=5 // pred_check
        _
      $region30: #{_forecast_forward.1} parent=5 // pred_check_branch
        %190 = sbr.rel (%p187) target = $region32
      $region31: #{_forecast_forward.1} parent=5 // pred_region
        %s191 = ssub.s32 %s16, 1
        %s192 = sand.u32 %s43, 1
        %s193 = scalar_lea.sflag [#allocation3], %s192
        %s194 = sand.u32 %s43, 1
        %s195 = smul.addr %s194, 16
        %s196 = scalar_lea.vmem [#allocation2], %s195
        // Predicated region
        $region33: #{_forecast_forward.1} parent=31 // pred_check
          %p197 = pneg %p56
        $region34: #{_forecast_forward.1} parent=31 // pred_check_branch
          %199 = sbr.rel (%p197) target = $region36
        $region35: #{_forecast_forward.1} parent=31 // pred_region
          %200 = dma.done %s193, 256
        $region36: #{_forecast_forward.1} parent=31 // pred_fallthru
          _
        // Predicated region
        $region37: #{_forecast_forward.1} parent=31 // pred_check
          %p201 = pneg %p77
        $region38: #{_forecast_forward.1} parent=31 // pred_check_branch
          %203 = sbr.rel (%p201) target = $region40
        $region39: #{_forecast_forward.1} parent=31 // pred_region
          %204 = dma.done [#allocation6], 512
        $region40: #{_forecast_forward.1} parent=31 // pred_fallthru
          _
        %s205 = sand.u32 %s43, 1
        %s206 = scalar_lea.sflag [#allocation3], %s205
        %s207 = sand.u32 %s43, 1
        %s208 = smul.addr %s207, 16
        %s209 = scalar_lea.vmem [#allocation2], %s208
        %p210 = pneg %p56
        %p211 = pneg %p53
        %p212 = pneg %p77
        %p213 = pneg %p74
        %p214 = pneg %p98
        %p215 = pneg %p95
        %p216 = pneg %p126
        %p217 = pneg %p123
        %s218 = sand.u32 %s113, 1
        %s219 = scalar_lea.sflag [#allocation4], %s218
        %s220 = sand.u32 %s113, 1
        %s221 = smul.addr %s220, 16
        %s222 = scalar_lea.vmem [#allocation7], %s221
        %s223 = smul.u32 2, %s26
        %s224 = smul.u32 2, %s26
        %v225 = vld [vmem:[%s196] sm:$0xff]
        %v226 = vld [vmem:[%s196 + $0x8] sm:$0xff]
        %v227 = vld [vmem:[#allocation5] sm:$0xff]
        %v228 = vld [vmem:[#allocation5 + $0x8] sm:$0xff]
        %v229 = vld [vmem:[#allocation5 + $0x10] sm:$0xff]
        %v230 = vld [vmem:[#allocation5 + $0x18] sm:$0xff]
        %v231 = vld [vmem:[%s2] sm:$0x1]
        %v233 = vlaneseq
        %v234 = vshrl.u32 %v233, 7
        %v235 = vsub.s32 0, %v234
        %v236 = vrot.slane %v231, %v235
        %vm238 = vcmask 261120
        %v240 = vsel %vm238, %v225, 0
        %v243 = vsel %vm238, %v226, 0
        %245 = vmatprep.subr.mxu0 0.0
        %246 = vmatpush1.msra.mxu0 %v227
        %247 = vmatprep.subr.mxu0 0.0
        %248 = vmatpush1.msra.mxu0 %v228
        %249 = vmatprep.subr.mxu0 0.0
        %250 = vmatpush1.msra.mxu0 %v229
        %251 = vmatprep.subr.mxu0 0.0
        %252 = vmatpush1.msra.mxu0 %v230
        %253 = vmatprep.subr.mxu0 0.0
        %254 = vmatpush1.msra.mxu0 0.0
        %255 = vmatprep.subr.mxu0 0.0
        %256 = vmatpush1.msra.mxu0 0.0
        %257 = vmatprep.subr.mxu0 0.0
        %258 = vmatpush1.msra.mxu0 0.0
        %259 = vmatprep.subr.mxu0 0.0
        %260 = vmatpush1.msra.mxu0 0.0
        %261 = vmatprep.subr.mxu0 0.0
        %262 = vmatpush1.msra.mxu0 0.0
        %263 = vmatprep.subr.mxu0 0.0
        %264 = vmatpush1.msra.mxu0 0.0
        %265 = vmatprep.subr.mxu0 0.0
        %266 = vmatpush1.msra.mxu0 0.0
        %267 = vmatprep.subr.mxu0 0.0
        %268 = vmatpush1.msra.mxu0 0.0
        %269 = vmatprep.subr.mxu0 0.0
        %270 = vmatpush1.msra.mxu0 0.0
        %271 = vmatprep.subr.mxu0 0.0
        %272 = vmatpush1.msra.mxu0 0.0
        %273 = vmatprep.subr.mxu0 0.0
        %274 = vmatpush1.msra.mxu0 0.0
        %275 = vmatprep.subr.mxu0 0.0
        %276 = vmatpush1.msra.mxu0 0.0
        %277 = vmatprep.subr.mxu0 0.0
        %278 = vmatpush1.msra.mxu0 0.0
        %279 = vmatprep.subr.mxu0 0.0
        %280 = vmatpush1.msra.mxu0 0.0
        %281 = vmatprep.subr.mxu0 0.0
        %282 = vmatpush1.msra.mxu0 0.0
        %283 = vmatprep.subr.mxu0 0.0
        %284 = vmatpush1.msra.mxu0 0.0
        %285 = vmatprep.subr.mxu0 0.0
        %286 = vmatpush1.msra.mxu0 0.0
        %287 = vmatprep.subr.mxu0 0.0
        %288 = vmatpush1.msra.mxu0 0.0
        %289 = vmatprep.subr.mxu0 0.0
        %290 = vmatpush1.msra.mxu0 0.0
        %291 = vmatprep.subr.mxu0 0.0
        %292 = vmatpush1.msra.mxu0 0.0
        %293 = vmatprep.subr.mxu0 0.0
        %294 = vmatpush1.msra.mxu0 0.0
        %295 = vmatprep.subr.mxu0 0.0
        %296 = vmatpush1.msra.mxu0 0.0
        %297 = vmatprep.subr.mxu0 0.0
        %298 = vmatpush1.msra.mxu0 0.0
        %299 = vmatprep.subr.mxu0 0.0
        %300 = vmatpush1.msra.mxu0 0.0
        %301 = vmatprep.subr.mxu0 0.0
        %302 = vmatpush1.msra.mxu0 0.0
        %303 = vmatprep.subr.mxu0 0.0
        %304 = vmatpush1.msra.mxu0 0.0
        %305 = vmatprep.subr.mxu0 0.0
        %306 = vmatpush1.msra.mxu0 0.0
        %307 = vmatprep.subr.mxu0 0.0
        %308 = vmatpush1.msra.mxu0 0.0
        %309 = vmatprep.mubr.f32.mxu0 0.0
        %310 = vmatmul.mubr.f32.gmra.mrb[0].mxu0 %v240
        %v311 = vpop.f32.mrb[0].mxu0
        %v312 = vadd.f32 %v236, %v311
        %v313 = vpop.f32.mrb[0].mxu0
        %314 = vmatprep.mubr.f32.mxu0 0.0
        %315 = vmatmul.mubr.f32.gmra.mrb[0].mxu0 %v243
        %v316 = vpop.f32.mrb[0].mxu0
        %v317 = vadd.f32 %v236, %v316
        %v318 = vpop.f32.mrb[0].mxu0
        %319 = vdwg.mxu0
        %320 = vst [vmem:[%s222] sm:$0xff] %v312
        %321 = vst [vmem:[%s222 + $0x8] sm:$0xff] %v317
        %s322 = sand.u32 %s113, 1
        %s323 = scalar_lea.sflag [#allocation4], %s322
        %s324 = sand.u32 %s113, 1
        %s325 = smul.addr %s324, 16
        %s326 = scalar_lea.vmem [#allocation7], %s325
        // Predicated region
        $region41: #{_forecast_forward.1} parent=31 // pred_check
          %p327 = pneg %p123
        $region42: #{_forecast_forward.1} parent=31 // pred_check_branch
          %329 = sbr.rel (%p327) target = $region44
        $region43: #{_forecast_forward.1} parent=31 // pred_region
          %s330 = smul.u32 2, %s26
          %s332 = ssub.s32 256, 256
          %333 = vsyncadd %s323, %s332
          %s334 = smul.addr %s25, 2
          %s335 = sadd.s32 %s330, %s334
          %s336 = smul.addr %s335, 128
          %s337 = scalar_lea.hbm %s3, %s336
          %s338 = sshll.u32 %s326, 4
          %s339 = int_to_ptr.vmem [resolvable:$true] %s338
          %344 = dma.vmem_to_hbm [thread:$0]  %s339, 256, %s337, %s323, 128, 128, 8
        $region44: #{_forecast_forward.1} parent=31 // pred_fallthru
          _
      $region32: #{_forecast_forward.1} parent=5 // pred_fallthru
        _
      %p345 = scmp.le.s32.totalorder 2, %s16
      // Predicated region
      $region45: #{_forecast_forward.1} parent=5 // pred_check
        %p346 = pneg %p345
      $region46: #{_forecast_forward.1} parent=5 // pred_check_branch
        %348 = sbr.rel (%p346) target = $region48
      $region47: #{_forecast_forward.1} parent=5 // pred_region
        %s349 = ssub.s32 %s16, 2
        // Predicated region
        $region49: #{_forecast_forward.1} parent=47 // pred_check
          %p350 = pneg %p129
        $region50: #{_forecast_forward.1} parent=47 // pred_check_branch
          %352 = sbr.rel (%p350) target = $region52
        $region51: #{_forecast_forward.1} parent=47 // pred_region
          %s353 = sand.u32 %s114, 1
          %s354 = scalar_lea.sflag [#allocation4], %s353
          %s355 = sand.u32 %s114, 1
          %s356 = smul.addr %s355, 16
          %s357 = scalar_lea.vmem [#allocation7], %s356
          %358 = dma.done %s354, 256
        $region52: #{_forecast_forward.1} parent=47 // pred_fallthru
          _
      $region48: #{_forecast_forward.1} parent=5 // pred_fallthru
        _
    $region6: #{_forecast_forward.1} parent=1 // loop_footer
      %s20 = sadd.s32 1, %s16
    $region7: #{_forecast_forward.1} parent=1 // loop_footer_branch
      %15 = sbr.rel target = $region3
    $region8: #{_forecast_forward.1} parent=1 // loop_exit
      _
    %359 = vsyncpa [#allocation3], 1
    %s360 = scalar_lea.sflag [#allocation3], 1
    %361 = vsyncpa %s360, 1
    %362 = vsyncpa [#allocation6], 1
    %363 = vsyncpa [#allocation4], 1
    %s364 = scalar_lea.sflag [#allocation4], 1
    %365 = vsyncpa %s364, 1

</llo_original>
